<compile_context>
chip_gen: v5e
topology: v5e:2x2
jax: 0.10.0
libtpu: 0.0.40
codegen_flags: <defaults>
</compile_context>

<pallas_src>
import numpy as np
import jax
import jax.numpy as jnp
from jax.experimental import pallas as pl
from jax.experimental.pallas import tpu as pltpu

EPS = 1e-05

AGGREGATORS = ("mean", "max", "min", "std")              # 4 aggregators
SCALERS = ("identity", "amplification", "attenuation")   # 3 scalers (folded into W)
N_AGG = len(AGGREGATORS)
CHUNK = 16                                               # sublane chunk for aggregation


def _round_up(x, m):
    return ((x + m - 1) // m) * m


def _lane_pad(n):
    """Smallest divisor of 128 (or multiple of 128) that is >= n."""
    if n > 128:
        return _round_up(n, 128)
    for d in (1, 2, 4, 8, 16, 32, 64, 128):
        if d >= n:
            return d
    return 128


# ------------------------------- kernel ----------------------------------
def _pna_kernel(mail_ref, hin_ref, w_ref, b_ref, out_ref, feat_ref):
    # mail_ref: (D, TR, L)   packed neighbor messages (P nodes per 128-lane group)
    # hin_ref : (TR, L)      packed input node features (residual)
    # w_ref   : (A*L, L)     scaler-folded, block-diagonal expanded weight
    # b_ref   : (1, L)       tiled bias
    # out_ref : (TR, L)      packed output
    # feat_ref: (TR, A*L)    VMEM scratch holding the aggregator features
    D, TR, L = mail_ref.shape
    inv_d = 1.0 / D

    # --- chunked single-pass aggregation over neighbors (D innermost) ---
    # Keeps the sum / sum-sq / max / min accumulators for one 16-row chunk in
    # vregs (~10 live) and writes the 4 aggregator blocks straight into the
    # feat scratch — no full-tile accumulators, no concatenate copy.
    @pl.loop(0, TR // CHUNK)
    def _(c):
        r0 = pl.multiple_of(c * CHUNK, CHUNK)
        x = mail_ref[0, pl.ds(r0, CHUNK), :].astype(jnp.float32)
        s = x
        ss = x * x
        mx = x
        mn = x
        for d in range(1, D):                         # D is small & static -> unrolled
            x = mail_ref[d, pl.ds(r0, CHUNK), :].astype(jnp.float32)
            s = s + x
            ss = ss + x * x
            mx = jnp.maximum(mx, x)
            mn = jnp.minimum(mn, x)
        mean = s * inv_d
        var = jnp.maximum(ss * inv_d - mean * mean, 0.0)
        std = jnp.sqrt(var + EPS)
        feat_ref[pl.ds(r0, CHUNK), 0 * L:1 * L] = mean
        feat_ref[pl.ds(r0, CHUNK), 1 * L:2 * L] = mx
        feat_ref[pl.ds(r0, CHUNK), 2 * L:3 * L] = mn
        feat_ref[pl.ds(r0, CHUNK), 3 * L:4 * L] = std

    # --- posttrans Linear (scalers pre-folded), relu, residual ---
    y = jnp.dot(feat_ref[...], w_ref[...], preferred_element_type=jnp.float32)
    y = jnp.maximum(y + b_ref[...], 0.0)              # F.relu
    y = y + hin_ref[...].astype(jnp.float32)          # residual
    # TODO(synk): dropout is identity in eval mode (p -> 0); not emitted.
    out_ref[...] = y.astype(out_ref.dtype)


# ------------------------------- wrapper ----------------------------------
def pna_simple_layer(h, nbr_idx, w, b, *, avg_d, node_tile=4096):
    """PNA simple layer forward (eval mode).

    h:       (N, F)      node features
    nbr_idx: (N, D)      fixed in-degree neighbor lists (int)
    w:       (12F, OUT)  posttrans Linear weight, rows ordered
                         [mean,max,min,std] x [identity,amplification,attenuation]
    b:       (OUT,)      posttrans Linear bias.   Residual requires OUT == F.
    """
    N, F = h.shape
    _, D = nbr_idx.shape
    OUT = w.shape[1]
    A = N_AGG
    assert OUT == F, "residual path requires in_dim == out_dim"
    assert w.shape[0] == 3 * A * F

    # --- lane-dense packing: pad feature width up to a divisor of 128 ---
    Fp = _lane_pad(F)                          # padded feature / output width
    P = 128 // Fp if Fp <= 128 else 1          # nodes packed per 128-lane group
    L = P * Fp                                 # packed lane width (multiple of 128)

    # --- tile / grid selection (>= 4 grid steps when N allows => >=2 per TC on v7x) ---
    base = CHUNK * P                           # sublane-chunk * packing alignment
    req = _round_up(max(node_tile, base), base)
    quarter = _round_up(max(-(-N // 4), 1), base)
    node_tile = min(req, quarter)
    Np = _round_up(N, node_tile)               # padded node count
    grid_n = Np // node_tile
    TR = node_tile // P                        # packed rows per tile (multiple of CHUNK)

    # --- fold the three scalers into the weight (compile-time constants D, avg_d) ---
    amp = float(np.log(D + 1) / avg_d)
    att = float(avg_d / np.log(D + 1))
    AF = A * F
    w_eff = w[:AF] + amp * w[AF:2 * AF] + att * w[2 * AF:3 * AF]     # (A*F, OUT)

    # --- zero-pad features/outputs; block-diagonal expand so the matmul emits
    #     the packed, lane-dense output directly ---
    w_r = jnp.pad(w_eff.reshape(A, F, OUT), ((0, 0), (0, Fp - F), (0, Fp - OUT)))
    eye = jnp.eye(P, dtype=w_r.dtype)
    w_big = jnp.einsum("afc,jk->ajfkc", w_r, eye).reshape(A * L, L)
    b_big = jnp.tile(jnp.pad(b, (0, Fp - OUT)), P).reshape(1, L)

    # --- pad indices/features BEFORE the gather; gather straight into (D, N, F) ---
    h_f = jnp.pad(h, ((0, 0), (0, Fp - F))) if Fp != F else h
    nbr = jnp.pad(nbr_idx, ((0, Np - N), (0, 0))) if Np != N else nbr_idx
    h_rows = jnp.pad(h_f, ((0, Np - N), (0, 0))) if Np != N else h_f

    mail = h_f[nbr.T]                              # (D, Np, Fp) — single gather, no transpose copy
    mail_packed = mail.reshape(D, Np // P, L)      # contiguous reshape
    hin_packed = h_rows.reshape(Np // P, L)

    # --- VMEM budget from the actual footprint (double-buffered tiles + scratch) ---
    tile_bytes = 4 * (2 * D * TR * L + 2 * TR * L + 2 * TR * L
                      + A * L * L + L + TR * A * L)
    vmem_limit = int(min(max(2 * tile_bytes, 16 << 20), 48 << 20))

    grid_spec = pltpu.PrefetchScalarGridSpec(
        num_scalar_prefetch=0,
        grid=(grid_n,),
        in_specs=[
            pl.BlockSpec((D, TR, L), lambda i: (0, i, 0)),     # mailbox tile
            pl.BlockSpec((TR, L), lambda i: (i, 0)),           # residual tile
            pl.BlockSpec((A * L, L), lambda i: (0, 0)),        # folded+expanded weight
            pl.BlockSpec((1, L), lambda i: (0, 0)),            # bias
        ],
        out_specs=pl.BlockSpec((TR, L), lambda i: (i, 0)),
        scratch_shapes=[pltpu.VMEM((TR, A * L), jnp.float32)],  # feat scratch
    )

    out_packed = pl.pallas_call(
        _pna_kernel,
        out_shape=jax.ShapeDtypeStruct((Np // P, L), jnp.float32),
        grid_spec=grid_spec,
        compiler_params=pltpu.CompilerParams(
            dimension_semantics=("parallel",),
            vmem_limit_bytes=vmem_limit,
        ),
    )(mail_packed, hin_packed, w_big, b_big)

    return out_packed.reshape(Np, Fp)[:N, :OUT]


# --------------------------- pure-JAX reference ---------------------------
def pna_reference(h, nbr_idx, w, b, *, avg_d):
    m = h[nbr_idx].astype(jnp.float32)             # (N, D, F)
    D = m.shape[1]
    h_mean = jnp.mean(m, axis=1)
    h_max = jnp.max(m, axis=1)
    h_min = jnp.min(m, axis=1)
    h_var = jnp.maximum(jnp.mean(m * m, axis=1) - h_mean * h_mean, 0.0)
    h_std = jnp.sqrt(h_var + EPS)
    agg = jnp.concatenate([h_mean, h_max, h_min, h_std], axis=1)
    feat = jnp.concatenate(
        [agg, agg * (np.log(D + 1) / avg_d), agg * (avg_d / np.log(D + 1))], axis=1
    )
    y = jnp.maximum(feat @ w + b[None, :], 0.0)
    return h.astype(jnp.float32) + y


# --------------------------------- main -----------------------------------
if __name__ == "__main__":
    key = jax.random.PRNGKey(0)

    def run_case(case_key, N, D, F, avg_d):
        k_h, k_nbr, k_w, k_b = jax.random.split(case_key, 4)
        h = jax.random.normal(k_h, (N, F), dtype=jnp.float32)
        nbr_idx = jax.random.randint(k_nbr, (N, D), 0, N)     # fixed-degree neighbor lists
        fan_in = N_AGG * len(SCALERS) * F                      # 12 * F
        w = (jax.random.normal(k_w, (fan_in, F), dtype=jnp.float32)
             / np.sqrt(fan_in)).astype(jnp.float32)
        b = jax.random.normal(k_b, (F,), dtype=jnp.float32) * 0.01

        out = jax.block_until_ready(pna_simple_layer(h, nbr_idx, w, b, avg_d=avg_d))
        ref = pna_reference(h, nbr_idx, w, b, avg_d=avg_d)
        np.testing.assert_allclose(np.asarray(out), np.asarray(ref), rtol=2e-5, atol=2e-5)

    k1, k2 = jax.random.split(key)
    # 256 nodes, in-degree 8, dim 32 (lane packing P=4, tile-aligned N)
    run_case(k1, N=256, D=8, F=32, avg_d=float(np.log(9)))
    # ragged / non-divisor case: 200 nodes, in-degree 5, dim 24 (lane-padded to 32)
    run_case(k2, N=200, D=5, F=24, avg_d=float(np.log(6)))

    print("KERNEL_OK")
</pallas_src>

<mosaic_0001>
module attributes {stable_mosaic.version = 11 : i64} {
  func.func @_pna_kernel(%arg0: i32, %arg1: memref<8x16x128xf32, #tpu.memory_space<vmem>>, %arg2: memref<16x128xf32, #tpu.memory_space<vmem>>, %arg3: memref<512x128xf32, #tpu.memory_space<vmem>>, %arg4: memref<1x128xf32, #tpu.memory_space<vmem>>, %arg5: memref<16x128xf32, #tpu.memory_space<vmem>>, %arg6: memref<16x512xf32, #tpu.memory_space<vmem>>) attributes {dimension_semantics = [#tpu.dimension_semantics<parallel>], iteration_bounds = array<i64: 4>, scalar_prefetch = 0 : i64, scratch_operands = 1 : i64, tpu.core_type = #tpu.core_type<tc>, window_params = [{transform_indices = @transform_0, window_bounds = array<i64: 8, 16, 128>}, {transform_indices = @transform_1, window_bounds = array<i64: 16, 128>}, {pipeline_mode = #tpu.pipeline_mode<synchronous>, transform_indices = @transform_2, window_bounds = array<i64: 512, 128>}, {pipeline_mode = #tpu.pipeline_mode<synchronous>, transform_indices = @transform_3, window_bounds = array<i64: 1, 128>}, {transform_indices = @transform_4, window_bounds = array<i64: 16, 128>}]} {
    %c0_i32 = arith.constant 0 : i32
    %c1_i32 = arith.constant 1 : i32
    %0 = arith.muli %c0_i32, %c1_i32 : i32
    %c0_i32_0 = arith.constant 0 : i32
    %1 = arith.addi %c0_i32_0, %0 : i32
    %c16_i32 = arith.constant 16 : i32
    %2 = arith.muli %1, %c16_i32 : i32
    %3 = tpu.assume_multiple %2, 16 : i32
    %c0 = arith.constant 0 : index
    %4 = arith.index_cast %3 : i32 to index
    %c0_1 = arith.constant 0 : index
    %5 = vector.load %arg1[%c0, %4, %c0_1] : memref<8x16x128xf32, #tpu.memory_space<vmem>>, vector<1x16x128xf32>
    %6 = vector.shape_cast %5 : vector<1x16x128xf32> to vector<16x128xf32>
    %7 = arith.mulf %6, %6 : vector<16x128xf32>
    %c1 = arith.constant 1 : index
    %8 = arith.index_cast %3 : i32 to index
    %c0_2 = arith.constant 0 : index
    %9 = vector.load %arg1[%c1, %8, %c0_2] : memref<8x16x128xf32, #tpu.memory_space<vmem>>, vector<1x16x128xf32>
    %10 = vector.shape_cast %9 : vector<1x16x128xf32> to vector<16x128xf32>
    %11 = arith.addf %6, %10 : vector<16x128xf32>
    %12 = arith.mulf %10, %10 : vector<16x128xf32>
    %13 = arith.addf %7, %12 : vector<16x128xf32>
    %14 = arith.maximumf %6, %10 : vector<16x128xf32>
    %15 = arith.minimumf %6, %10 : vector<16x128xf32>
    %c2 = arith.constant 2 : index
    %16 = arith.index_cast %3 : i32 to index
    %c0_3 = arith.constant 0 : index
    %17 = vector.load %arg1[%c2, %16, %c0_3] : memref<8x16x128xf32, #tpu.memory_space<vmem>>, vector<1x16x128xf32>
    %18 = vector.shape_cast %17 : vector<1x16x128xf32> to vector<16x128xf32>
    %19 = arith.addf %11, %18 : vector<16x128xf32>
    %20 = arith.mulf %18, %18 : vector<16x128xf32>
    %21 = arith.addf %13, %20 : vector<16x128xf32>
    %22 = arith.maximumf %14, %18 : vector<16x128xf32>
    %23 = arith.minimumf %15, %18 : vector<16x128xf32>
    %c3 = arith.constant 3 : index
    %24 = arith.index_cast %3 : i32 to index
    %c0_4 = arith.constant 0 : index
    %25 = vector.load %arg1[%c3, %24, %c0_4] : memref<8x16x128xf32, #tpu.memory_space<vmem>>, vector<1x16x128xf32>
    %26 = vector.shape_cast %25 : vector<1x16x128xf32> to vector<16x128xf32>
    %27 = arith.addf %19, %26 : vector<16x128xf32>
    %28 = arith.mulf %26, %26 : vector<16x128xf32>
    %29 = arith.addf %21, %28 : vector<16x128xf32>
    %30 = arith.maximumf %22, %26 : vector<16x128xf32>
    %31 = arith.minimumf %23, %26 : vector<16x128xf32>
    %c4 = arith.constant 4 : index
    %32 = arith.index_cast %3 : i32 to index
    %c0_5 = arith.constant 0 : index
    %33 = vector.load %arg1[%c4, %32, %c0_5] : memref<8x16x128xf32, #tpu.memory_space<vmem>>, vector<1x16x128xf32>
    %34 = vector.shape_cast %33 : vector<1x16x128xf32> to vector<16x128xf32>
    %35 = arith.addf %27, %34 : vector<16x128xf32>
    %36 = arith.mulf %34, %34 : vector<16x128xf32>
    %37 = arith.addf %29, %36 : vector<16x128xf32>
    %38 = arith.maximumf %30, %34 : vector<16x128xf32>
    %39 = arith.minimumf %31, %34 : vector<16x128xf32>
    %c5 = arith.constant 5 : index
    %40 = arith.index_cast %3 : i32 to index
    %c0_6 = arith.constant 0 : index
    %41 = vector.load %arg1[%c5, %40, %c0_6] : memref<8x16x128xf32, #tpu.memory_space<vmem>>, vector<1x16x128xf32>
    %42 = vector.shape_cast %41 : vector<1x16x128xf32> to vector<16x128xf32>
    %43 = arith.addf %35, %42 : vector<16x128xf32>
    %44 = arith.mulf %42, %42 : vector<16x128xf32>
    %45 = arith.addf %37, %44 : vector<16x128xf32>
    %46 = arith.maximumf %38, %42 : vector<16x128xf32>
    %47 = arith.minimumf %39, %42 : vector<16x128xf32>
    %c6 = arith.constant 6 : index
    %48 = arith.index_cast %3 : i32 to index
    %c0_7 = arith.constant 0 : index
    %49 = vector.load %arg1[%c6, %48, %c0_7] : memref<8x16x128xf32, #tpu.memory_space<vmem>>, vector<1x16x128xf32>
    %50 = vector.shape_cast %49 : vector<1x16x128xf32> to vector<16x128xf32>
    %51 = arith.addf %43, %50 : vector<16x128xf32>
    %52 = arith.mulf %50, %50 : vector<16x128xf32>
    %53 = arith.addf %45, %52 : vector<16x128xf32>
    %54 = arith.maximumf %46, %50 : vector<16x128xf32>
    %55 = arith.minimumf %47, %50 : vector<16x128xf32>
    %c7 = arith.constant 7 : index
    %56 = arith.index_cast %3 : i32 to index
    %c0_8 = arith.constant 0 : index
    %57 = vector.load %arg1[%c7, %56, %c0_8] : memref<8x16x128xf32, #tpu.memory_space<vmem>>, vector<1x16x128xf32>
    %58 = vector.shape_cast %57 : vector<1x16x128xf32> to vector<16x128xf32>
    %59 = arith.addf %51, %58 : vector<16x128xf32>
    %60 = arith.mulf %58, %58 : vector<16x128xf32>
    %61 = arith.addf %53, %60 : vector<16x128xf32>
    %62 = arith.maximumf %54, %58 : vector<16x128xf32>
    %63 = arith.minimumf %55, %58 : vector<16x128xf32>
    %cst = arith.constant 1.250000e-01 : f32
    %64 = vector.broadcast %cst : f32 to vector<16x128xf32>
    %65 = arith.mulf %59, %64 : vector<16x128xf32>
    %cst_9 = arith.constant 1.250000e-01 : f32
    %66 = vector.broadcast %cst_9 : f32 to vector<16x128xf32>
    %67 = arith.mulf %61, %66 : vector<16x128xf32>
    %68 = arith.mulf %65, %65 : vector<16x128xf32>
    %69 = arith.subf %67, %68 : vector<16x128xf32>
    %cst_10 = arith.constant 0.000000e+00 : f32
    %70 = vector.broadcast %cst_10 : f32 to vector<16x128xf32>
    %71 = arith.maximumf %69, %70 : vector<16x128xf32>
    %cst_11 = arith.constant 9.99999974E-6 : f32
    %72 = vector.broadcast %cst_11 : f32 to vector<16x128xf32>
    %73 = arith.addf %71, %72 : vector<16x128xf32>
    %74 = math.sqrt %73 : vector<16x128xf32>
    %75 = arith.index_cast %3 : i32 to index
    %c0_12 = arith.constant 0 : index
    %76 = vector.load %arg6[%75, %c0_12] : memref<16x512xf32, #tpu.memory_space<vmem>>, vector<16x128xf32>
    tpu.vector_store %arg6[%75, %c0_12], %65 {strides = array<i32>} : memref<16x512xf32, #tpu.memory_space<vmem>>, vector<16x128xf32>,
    %77 = arith.index_cast %3 : i32 to index
    %c128 = arith.constant 128 : index
    %78 = vector.load %arg6[%77, %c128] : memref<16x512xf32, #tpu.memory_space<vmem>>, vector<16x128xf32>
    tpu.vector_store %arg6[%77, %c128], %62 {strides = array<i32>} : memref<16x512xf32, #tpu.memory_space<vmem>>, vector<16x128xf32>,
    %79 = arith.index_cast %3 : i32 to index
    %c256 = arith.constant 256 : index
    %80 = vector.load %arg6[%79, %c256] : memref<16x512xf32, #tpu.memory_space<vmem>>, vector<16x128xf32>
    tpu.vector_store %arg6[%79, %c256], %63 {strides = array<i32>} : memref<16x512xf32, #tpu.memory_space<vmem>>, vector<16x128xf32>,
    %81 = arith.index_cast %3 : i32 to index
    %c384 = arith.constant 384 : index
    %82 = vector.load %arg6[%81, %c384] : memref<16x512xf32, #tpu.memory_space<vmem>>, vector<16x128xf32>
    tpu.vector_store %arg6[%81, %c384], %74 {strides = array<i32>} : memref<16x512xf32, #tpu.memory_space<vmem>>, vector<16x128xf32>,
    %c1_i32_13 = arith.constant 1 : i32
    %c0_14 = arith.constant 0 : index
    %c0_15 = arith.constant 0 : index
    %83 = vector.load %arg6[%c0_14, %c0_15] : memref<16x512xf32, #tpu.memory_space<vmem>>, vector<16x512xf32>
    %c0_16 = arith.constant 0 : index
    %c0_17 = arith.constant 0 : index
    %84 = vector.load %arg3[%c0_16, %c0_17] : memref<512x128xf32, #tpu.memory_space<vmem>>, vector<512x128xf32>
    %cst_18 = arith.constant dense<0.000000e+00> : vector<16x128xf32>
    %85 = tpu.matmul %83, %84, %cst_18 {dimension_numbers = #tpu.dot_dimension_numbers<[1], [0], [0], [1], [0, 0, 1, 1], [], []>} : vector<16x512xf32>, vector<512x128xf32>, vector<16x128xf32> -> vector<16x128xf32>
    %c0_19 = arith.constant 0 : index
    %c0_20 = arith.constant 0 : index
    %86 = vector.load %arg4[%c0_19, %c0_20] : memref<1x128xf32, #tpu.memory_space<vmem>>, vector<1x128xf32>
    %87 = vector.broadcast %86 : vector<1x128xf32> to vector<16x128xf32>
    %88 = arith.addf %85, %87 : vector<16x128xf32>
    %cst_21 = arith.constant 0.000000e+00 : f32
    %89 = vector.broadcast %cst_21 : f32 to vector<16x128xf32>
    %90 = arith.maximumf %88, %89 : vector<16x128xf32>
    %c0_22 = arith.constant 0 : index
    %c0_23 = arith.constant 0 : index
    %91 = vector.load %arg2[%c0_22, %c0_23] : memref<16x128xf32, #tpu.memory_space<vmem>>, vector<16x128xf32>
    %92 = arith.addf %90, %91 : vector<16x128xf32>
    %c0_24 = arith.constant 0 : index
    %c0_25 = arith.constant 0 : index
    %93 = vector.load %arg5[%c0_24, %c0_25] : memref<16x128xf32, #tpu.memory_space<vmem>>, vector<16x128xf32>
    tpu.vector_store %arg5[%c0_24, %c0_25], %92 {strides = array<i32>} : memref<16x128xf32, #tpu.memory_space<vmem>>, vector<16x128xf32>,
    return
  }
  func.func @transform_0(%arg0: i32) -> (i32, i32, i32) {
    %c0_i32 = arith.constant 0 : i32
    %c0_i32_0 = arith.constant 0 : i32
    %c0_i32_1 = arith.constant 0 : i32
    return %c0_i32, %arg0, %c0_i32_0 : i32, i32, i32
  }
  func.func @transform_1(%arg0: i32) -> (i32, i32) {
    %c0_i32 = arith.constant 0 : i32
    %c0_i32_0 = arith.constant 0 : i32
    return %arg0, %c0_i32 : i32, i32
  }
  func.func @transform_2(%arg0: i32) -> (i32, i32) {
    %c0_i32 = arith.constant 0 : i32
    %c0_i32_0 = arith.constant 0 : i32
    %c0_i32_1 = arith.constant 0 : i32
    return %c0_i32, %c0_i32_0 : i32, i32
  }
  func.func @transform_3(%arg0: i32) -> (i32, i32) {
    %c0_i32 = arith.constant 0 : i32
    %c0_i32_0 = arith.constant 0 : i32
    %c0_i32_1 = arith.constant 0 : i32
    return %c0_i32, %c0_i32_0 : i32, i32
  }
  func.func @transform_4(%arg0: i32) -> (i32, i32) {
    %c0_i32 = arith.constant 0 : i32
    %c0_i32_0 = arith.constant 0 : i32
    return %arg0, %c0_i32 : i32, i32
  }
}

</mosaic_0001>

<llo_original>
// kernel: tpu_custom_call.1
$region0: #{tpu_custom_call.1}
  #allocation0 [shape = 'u32[]', space=smem, size = 0x4, offset = 0x4, fixed_abs, tag = 'smem constant byte address 0x4 - core index']
  #allocation1 [shape = 'u32[72,128]{1,0:T(1,128)}', space=vmem, size = 0x9000, scoped, tag = 'internal scratch']
  #allocation2 [shape = 'f32[16,512]{1,0:T(8,128)}', space=vmem, size = 0x8000, scoped, tag = 'scratch operand']
  #allocation10 [shape = 's32[]', space=sflag, size = 0x4, offset = 0, fixed_abs, tag = 'sflag constant byte address 0x0 - dummy sync flag']
  %s0 = inlined_call_operand.hbm [shape: f32[8,64,128], index: 0, kind: input, shape index: {}]
  %s1 = inlined_call_operand.hbm [shape: f32[64,128], index: 1, kind: input, shape index: {}]
  %s2 = inlined_call_operand.hbm [shape: f32[512,128], index: 2, kind: input, shape index: {}]
  %s3 = inlined_call_operand.vmem [shape: f32[1,128], index: 3, kind: input, shape index: {}]
  %s4 = inlined_call_operand.hbm [shape: f32[64,128], index: 4, kind: output, shape index: {}]
  %s5 = sld [smem:[#allocation0]]
  $region61: #{tpu_custom_call.1} parent=0
    _
  %s7 = ssub.s32 1, %s5
  %s8 = scalar_select 0, %s7, %s5
  $region1: #{tpu_custom_call.1} parent=0
    #allocation3 [shape = 'u8[131072]{0}', space=vmem, size = 0x20000, scoped, tag = 'input window, operand 0']
    #allocation4 [shape = 's32[2]{0}', space=sflag, size = 0x8, scoped, tag = 'scoped memory for tpu_custom_call.1']
    #allocation5 [shape = 's32[2]{0}', space=sflag, size = 0x8, scoped, tag = 'scoped memory for tpu_custom_call.1']
    #allocation6 [shape = 'u8[16384]{0}', space=vmem, size = 0x4000, scoped, tag = 'input window, operand 1']
    #allocation7 [shape = 's32[2]{0}', space=sflag, size = 0x8, scoped, tag = 'scoped memory for tpu_custom_call.1']
    #allocation8 [shape = 'u8[262144]{0}', space=vmem, size = 0x40000, scoped, tag = 'input window, operand 2, single buffered']
    #allocation9 [shape = 'u8[16384]{0}', space=vmem, size = 0x4000, scoped, tag = 'output window, operand 0']
    %9 = vsyncpa [#allocation4], 0
    %s10 = scalar_lea.sflag [#allocation4], 1
    %11 = vsyncpa %s10, 0
    %12 = vsyncpa [#allocation7], 0
    %s13 = scalar_lea.sflag [#allocation7], 1
    %14 = vsyncpa %s13, 0
    %15 = vsyncpa [#allocation5], 0
    %s16 = scalar_lea.sflag [#allocation5], 1
    %17 = vsyncpa %s16, 0
    loop: start=0, step=1, limit=6
    $region2: #{tpu_custom_call.1} parent=1 // loop_pre_header
      _
    $region3: #{tpu_custom_call.1} parent=1 // loop_header
      %s19 = sphi 0, %s23
      %p20 = scmp.ge.s32.totalorder %s19, 6
      %s29 = sphi 0, %s31
      %s32 = sphi 0, %s29
      %s33 = sphi 0, %s32
      %s49 = sphi 0, %s33
      %s55 = sphi 0, %s57
      %s58 = sphi 0, %s55
      %s59 = sphi 0, %s58
      %s75 = sphi 0, %s59
      %s79 = sphi 0, %s79
      %s81 = sphi 0, %s79
      %s82 = sphi 0, %s81
      %s96 = sphi 0, %s82
      %s100 = sphi 0, %s100
      %s102 = sphi 0, %s100
      %s103 = sphi 0, %s102
      %s117 = sphi 0, %s103
      %s123 = sphi 0, %s125
      %s126 = sphi 0, %s123
      %s127 = sphi 0, %s126
      %s143 = sphi 0, %s127
    $region4: #{tpu_custom_call.1} parent=1 // loop_header_branch
      %22 = sbr.rel (%p20) target = $region8
    $region5: #{tpu_custom_call.1} parent=1 // loop_body
      %s24 = ssub.s32 %s19, 1
      %s25 = ssub.s32 %s19, 2
      %s26 = sadd.s32 %s19, 1
      %s27 = ssub.s32 %s19, %s26
      %p28 = scmp.eq.s32.totalorder %s27, 0
      %s30 = sadd.s32 %s29, 1
      %s31 = scalar_select %p28, %s29, %s30
      %p34 = pneg %p28
      %p35 = scmp.eq.s32.totalorder %s19, 3
      %p36 = por %p34, %p35
      %p37 = scmp.ne.s32.totalorder %s29, %s32
      %p38 = scmp.eq.s32.totalorder %s19, 0
      %p39 = por %p37, %p38
      %p40 = scmp.ne.s32.totalorder %s29, %s32
      %p41 = scmp.eq.s32.totalorder %s24, 3
      %p42 = por %p40, %p41
      %p43 = scmp.ne.s32.totalorder %s32, %s33
      %p44 = scmp.eq.s32.totalorder %s24, 0
      %p45 = por %p43, %p44
      %p46 = scmp.ne.s32.totalorder %s32, %s33
      %p47 = scmp.eq.s32.totalorder %s25, 3
      %p48 = por %p46, %p47
      %p50 = scmp.ne.s32.totalorder %s33, %s49
      %p51 = scmp.eq.s32.totalorder %s25, 0
      %p52 = por %p50, %p51
      %s53 = ssub.s32 %s19, %s26
      %p54 = scmp.eq.s32.totalorder %s53, 0
      %s56 = sadd.s32 %s55, 1
      %s57 = scalar_select %p54, %s55, %s56
      %p60 = pneg %p54
      %p61 = scmp.eq.s32.totalorder %s19, 3
      %p62 = por %p60, %p61
      %p63 = scmp.ne.s32.totalorder %s55, %s58
      %p64 = scmp.eq.s32.totalorder %s19, 0
      %p65 = por %p63, %p64
      %p66 = scmp.ne.s32.totalorder %s55, %s58
      %p67 = scmp.eq.s32.totalorder %s24, 3
      %p68 = por %p66, %p67
      %p69 = scmp.ne.s32.totalorder %s58, %s59
      %p70 = scmp.eq.s32.totalorder %s24, 0
      %p71 = por %p69, %p70
      %p72 = scmp.ne.s32.totalorder %s58, %s59
      %p73 = scmp.eq.s32.totalorder %s25, 3
      %p74 = por %p72, %p73
      %p76 = scmp.ne.s32.totalorder %s59, %s75
      %p77 = scmp.eq.s32.totalorder %s25, 0
      %p78 = por %p76, %p77
      %s80 = sadd.s32 %s79, 1
      %p83 = scmp.eq.s32.totalorder %s19, 3
      %p84 = scmp.ne.s32.totalorder %s79, %s81
      %p85 = scmp.eq.s32.totalorder %s19, 0
      %p86 = por %p84, %p85
      %p87 = scmp.ne.s32.totalorder %s79, %s81
      %p88 = scmp.eq.s32.totalorder %s24, 3
      %p89 = por %p87, %p88
      %p90 = scmp.ne.s32.totalorder %s81, %s82
      %p91 = scmp.eq.s32.totalorder %s24, 0
      %p92 = por %p90, %p91
      %p93 = scmp.ne.s32.totalorder %s81, %s82
      %p94 = scmp.eq.s32.totalorder %s25, 3
      %p95 = por %p93, %p94
      %p97 = scmp.ne.s32.totalorder %s82, %s96
      %p98 = scmp.eq.s32.totalorder %s25, 0
      %p99 = por %p97, %p98
      %s101 = sadd.s32 %s100, 1
      %p104 = scmp.eq.s32.totalorder %s19, 3
      %p105 = scmp.ne.s32.totalorder %s100, %s102
      %p106 = scmp.eq.s32.totalorder %s19, 0
      %p107 = por %p105, %p106
      %p108 = scmp.ne.s32.totalorder %s100, %s102
      %p109 = scmp.eq.s32.totalorder %s24, 3
      %p110 = por %p108, %p109
      %p111 = scmp.ne.s32.totalorder %s102, %s103
      %p112 = scmp.eq.s32.totalorder %s24, 0
      %p113 = por %p111, %p112
      %p114 = scmp.ne.s32.totalorder %s102, %s103
      %p115 = scmp.eq.s32.totalorder %s25, 3
      %p116 = por %p114, %p115
      %p118 = scmp.ne.s32.totalorder %s103, %s117
      %p119 = scmp.eq.s32.totalorder %s25, 0
      %p120 = por %p118, %p119
      %s121 = ssub.s32 %s19, %s26
      %p122 = scmp.eq.s32.totalorder %s121, 0
      %s124 = sadd.s32 %s123, 1
      %s125 = scalar_select %p122, %s123, %s124
      %p128 = pneg %p122
      %p129 = scmp.eq.s32.totalorder %s19, 3
      %p130 = por %p128, %p129
      %p131 = scmp.ne.s32.totalorder %s123, %s126
      %p132 = scmp.eq.s32.totalorder %s19, 0
      %p133 = por %p131, %p132
      %p134 = scmp.ne.s32.totalorder %s123, %s126
      %p135 = scmp.eq.s32.totalorder %s24, 3
      %p136 = por %p134, %p135
      %p137 = scmp.ne.s32.totalorder %s126, %s127
      %p138 = scmp.eq.s32.totalorder %s24, 0
      %p139 = por %p137, %p138
      %p140 = scmp.ne.s32.totalorder %s126, %s127
      %p141 = scmp.eq.s32.totalorder %s25, 3
      %p142 = por %p140, %p141
      %p144 = scmp.ne.s32.totalorder %s127, %s143
      %p145 = scmp.eq.s32.totalorder %s25, 0
      %p146 = por %p144, %p145
      %p147 = scmp.le.s32.totalorder 1, %s19
      %p148 = scmp.lt.s32.totalorder %s19, 5
      %p149 = pnand %p147, %p148
      %p150 = pneg %p149
      // Predicated region
      $region9: #{tpu_custom_call.1} parent=5 // pred_check
        _
      $region10: #{tpu_custom_call.1} parent=5 // pred_check_branch
        %152 = sbr.rel (%p149) target = $region12
      $region11: #{tpu_custom_call.1} parent=5 // pred_region
        %s153 = ssub.s32 %s19, 1
        // Predicated region
        $region13: #{tpu_custom_call.1} parent=11 // pred_check
          %p154 = pneg %p92
        $region14: #{tpu_custom_call.1} parent=11 // pred_check_branch
          %156 = sbr.rel (%p154) target = $region16
        $region15: #{tpu_custom_call.1} parent=11 // pred_region
          %158 = vsyncadd [#allocation7], 0
          %s159 = sshll.u32 %s2, 4
          %s160 = int_to_ptr.hbm [resolvable:$true] %s159
          %s161 = sshll.u32 [#allocation8], 4
          %s162 = int_to_ptr.vmem [resolvable:$true] %s161
          %167 = dma.hbm_to_vmem [thread:$0]  %s160, 8192, %s162, [#allocation7], 128, 128, 8
        $region16: #{tpu_custom_call.1} parent=11 // pred_fallthru
          _
        // Predicated region
        $region17: #{tpu_custom_call.1} parent=11 // pred_check
          %p168 = pneg %p113
        $region18: #{tpu_custom_call.1} parent=11 // pred_check_branch
          %170 = sbr.rel (%p168) target = $region20
        $region19: #{tpu_custom_call.1} parent=11 // pred_region
          _
        $region20: #{tpu_custom_call.1} parent=11 // pred_fallthru
          _
      $region12: #{tpu_custom_call.1} parent=5 // pred_fallthru
        _
      %p171 = scmp.lt.s32.totalorder %s19, 4
      // Predicated region
      $region21: #{tpu_custom_call.1} parent=5 // pred_check
        %p172 = pneg %p171
      $region22: #{tpu_custom_call.1} parent=5 // pred_check_branch
        %174 = sbr.rel (%p172) target = $region24
      $region23: #{tpu_custom_call.1} parent=5 // pred_region
        // Predicated region
        $region25: #{tpu_custom_call.1} parent=23 // pred_check
          %p175 = pneg %p39
        $region26: #{tpu_custom_call.1} parent=23 // pred_check_branch
          %177 = sbr.rel (%p175) target = $region28
        $region27: #{tpu_custom_call.1} parent=23 // pred_region
          #allocation11 [shape = 'u32[6]{0}', space=smem, size = 0x18, scoped, tag = 'DMA stride descriptor']
          %s178 = sand.u32 %s29, 1
          %s179 = scalar_lea.sflag [#allocation4], %s178
          %s180 = sand.u32 %s29, 1
          %s181 = smul.addr %s180, 128
          %s182 = scalar_lea.vmem [#allocation3], %s181
          %s183 = smul.u32 2, %s19
          %185 = vsyncadd %s179, 0
          %s186 = smul.addr %s183, 8
          %s187 = scalar_lea.hbm %s0, %s186
          %s189 = sshll.u32 1, 14
          %s190 = sxor.u32 4294967295, %s189
          %s192 = sld [smem:[#allocation0]]
          %s193 = sadd.s32 2, %s192
          %s195 = sshll.u32 7, 26
          %s196 = sxor.u32 4294967295, %s195
          %s197 = sand.u32 0, %s196
          %s198 = sshll.u32 %s193, 26
          %s199 = sor.u32 %s197, %s198
          %s200 = sshll.u32 %s187, 4
          %s201 = int_to_ptr.hbm [resolvable:$true] %s200
          %s202 = sshll.u32 %s182, 4
          %s203 = int_to_ptr.vmem [resolvable:$true] %s202
          %209 = sst [smem:[#allocation11]] 1024
          %s210 = scalar_lea.smem [#allocation11], 1
          %211 = sst [smem:[%s210]] 256
          %s212 = scalar_lea.smem [#allocation11], 2
          %213 = sst [smem:[%s212]] 2
          %s214 = scalar_lea.smem [#allocation11], 3
          %215 = sst [smem:[%s214]] 128
          %s216 = scalar_lea.smem [#allocation11], 4
          %217 = sst [smem:[%s216]] 128
          %s218 = scalar_lea.smem [#allocation11], 5
          %219 = sst [smem:[%s218]] 8
          %221 = dma.general %s201, 2048, %s203, %s179, [#allocation10], [#allocation11], %s199, 0
        $region28: #{tpu_custom_call.1} parent=23 // pred_fallthru
          _
        // Predicated region
        $region29: #{tpu_custom_call.1} parent=23 // pred_check
          %p222 = pneg %p65
        $region30: #{tpu_custom_call.1} parent=23 // pred_check_branch
          %224 = sbr.rel (%p222) target = $region32
        $region31: #{tpu_custom_call.1} parent=23 // pred_region
          %s225 = sand.u32 %s19, 1
          %s226 = scalar_lea.sflag [#allocation7], %s225
          %s227 = sand.u32 %s55, 1
          %s228 = smul.addr %s227, 16
          %s229 = scalar_lea.vmem [#allocation6], %s228
          %s230 = smul.u32 2, %s19
          %232 = vsyncadd %s226, 0
          %s233 = smul.addr %s230, 8
          %s234 = scalar_lea.hbm %s1, %s233
          %s235 = sshll.u32 %s234, 4
          %s236 = int_to_ptr.hbm [resolvable:$true] %s235
          %s237 = sshll.u32 %s229, 4
          %s238 = int_to_ptr.vmem [resolvable:$true] %s237
          %243 = dma.hbm_to_vmem [thread:$0]  %s236, 256, %s238, %s226, 128, 128, 8
        $region32: #{tpu_custom_call.1} parent=23 // pred_fallthru
          _
      $region24: #{tpu_custom_call.1} parent=5 // pred_fallthru
        _
      %p244 = scmp.le.s32.totalorder 1, %s19
      %p245 = scmp.lt.s32.totalorder %s19, 5
      %p246 = pnand %p244, %p245
      %p247 = pneg %p246
      // Predicated region
      $region33: #{tpu_custom_call.1} parent=5 // pred_check
        _
      $region34: #{tpu_custom_call.1} parent=5 // pred_check_branch
        %249 = sbr.rel (%p246) target = $region36
      $region35: #{tpu_custom_call.1} parent=5 // pred_region
        %s250 = ssub.s32 %s19, 1
        %s251 = sand.u32 %s32, 1
        %s252 = scalar_lea.sflag [#allocation4], %s251
        %s253 = sand.u32 %s32, 1
        %s254 = smul.addr %s253, 128
        %s255 = scalar_lea.vmem [#allocation3], %s254
        // Predicated region
        $region37: #{tpu_custom_call.1} parent=35 // pred_check
          %p256 = pneg %p45
        $region38: #{tpu_custom_call.1} parent=35 // pred_check_branch
          %258 = sbr.rel (%p256) target = $region40
        $region39: #{tpu_custom_call.1} parent=35 // pred_region
          %260 = dma.done %s252, 2048
        $region40: #{tpu_custom_call.1} parent=35 // pred_fallthru
          _
        %s261 = sand.u32 %s24, 1
        %s262 = scalar_lea.sflag [#allocation7], %s261
        %s263 = sand.u32 %s58, 1
        %s264 = smul.addr %s263, 16
        %s265 = scalar_lea.vmem [#allocation6], %s264
        // Predicated region
        $region41: #{tpu_custom_call.1} parent=35 // pred_check
          %p266 = pneg %p71
        $region42: #{tpu_custom_call.1} parent=35 // pred_check_branch
          %268 = sbr.rel (%p266) target = $region44
        $region43: #{tpu_custom_call.1} parent=35 // pred_region
          %270 = dma.done %s262, 256
        $region44: #{tpu_custom_call.1} parent=35 // pred_fallthru
          _
        // Predicated region
        $region45: #{tpu_custom_call.1} parent=35 // pred_check
          %p271 = pneg %p92
        $region46: #{tpu_custom_call.1} parent=35 // pred_check_branch
          %273 = sbr.rel (%p271) target = $region48
        $region47: #{tpu_custom_call.1} parent=35 // pred_region
          %275 = dma.done [#allocation7], 8192
        $region48: #{tpu_custom_call.1} parent=35 // pred_fallthru
          _
        %s276 = sand.u32 %s32, 1
        %s277 = scalar_lea.sflag [#allocation4], %s276
        %s278 = sand.u32 %s32, 1
        %s279 = smul.addr %s278, 128
        %s280 = scalar_lea.vmem [#allocation3], %s279
        %p281 = pneg %p45
        %p282 = pneg %p42
        %s283 = sand.u32 %s24, 1
        %s284 = scalar_lea.sflag [#allocation7], %s283
        %s285 = sand.u32 %s58, 1
        %s286 = smul.addr %s285, 16
        %s287 = scalar_lea.vmem [#allocation6], %s286
        %p288 = pneg %p71
        %p289 = pneg %p68
        %p290 = pneg %p92
        %p291 = pneg %p89
        %p292 = pneg %p113
        %p293 = pneg %p110
        %p294 = pneg %p139
        %p295 = pneg %p136
        %s296 = sand.u32 %s126, 1
        %s297 = scalar_lea.sflag [#allocation5], %s296
        %s298 = sand.u32 %s126, 1
        %s299 = smul.addr %s298, 16
        %s300 = scalar_lea.vmem [#allocation9], %s299
        %s301 = smul.u32 2, %s24
        %s302 = smul.u32 2, %s24
        %s303 = smul.u32 2, %s24
        %v304 = vld [vmem:[%s255] sm:$0xff]
        %v305 = vld [vmem:[%s255 + $0x8] sm:$0xff]
        %v306 = vmul.f32 %v304, %v304
        %v307 = vmul.f32 %v305, %v305
        %s308 = sadd.s32 0, 16
        %s309 = scalar_lea.vmem %s255, %s308 [#allocation3]
        %v310 = vld [vmem:[%s309] sm:$0xff]
        %v311 = vld [vmem:[%s309 + $0x8] sm:$0xff]
        %v312 = vadd.f32 %v304, %v310
        %v313 = vadd.f32 %v305, %v311
        %v314 = vmul.f32 %v310, %v310
        %v315 = vmul.f32 %v311, %v311
        %v316 = vadd.f32 %v306, %v314
        %v317 = vadd.f32 %v307, %v315
        %v318 = vmax.f32 %v304, %v310
        %v319 = vmax.f32 %v305, %v311
        %v320 = vmin.f32 %v304, %v310
        %v321 = vmin.f32 %v305, %v311
        %s322 = sadd.s32 0, 32
        %s323 = scalar_lea.vmem %s255, %s322 [#allocation3]
        %v324 = vld [vmem:[%s323] sm:$0xff]
        %v325 = vld [vmem:[%s323 + $0x8] sm:$0xff]
        %v326 = vadd.f32 %v312, %v324
        %v327 = vadd.f32 %v313, %v325
        %v328 = vmul.f32 %v324, %v324
        %v329 = vmul.f32 %v325, %v325
        %v330 = vadd.f32 %v316, %v328
        %v331 = vadd.f32 %v317, %v329
        %v332 = vmax.f32 %v318, %v324
        %v333 = vmax.f32 %v319, %v325
        %v334 = vmin.f32 %v320, %v324
        %v335 = vmin.f32 %v321, %v325
        %s336 = sadd.s32 0, 48
        %s337 = scalar_lea.vmem %s255, %s336 [#allocation3]
        %v338 = vld [vmem:[%s337] sm:$0xff]
        %v339 = vld [vmem:[%s337 + $0x8] sm:$0xff]
        %v340 = vadd.f32 %v326, %v338
        %v341 = vadd.f32 %v327, %v339
        %v342 = vmul.f32 %v338, %v338
        %v343 = vmul.f32 %v339, %v339
        %v344 = vadd.f32 %v330, %v342
        %v345 = vadd.f32 %v331, %v343
        %v346 = vmax.f32 %v332, %v338
        %v347 = vmax.f32 %v333, %v339
        %v348 = vmin.f32 %v334, %v338
        %v349 = vmin.f32 %v335, %v339
        %s350 = sadd.s32 0, 64
        %s351 = scalar_lea.vmem %s255, %s350 [#allocation3]
        %v352 = vld [vmem:[%s351] sm:$0xff]
        %v353 = vld [vmem:[%s351 + $0x8] sm:$0xff]
        %v354 = vadd.f32 %v340, %v352
        %v355 = vadd.f32 %v341, %v353
        %v356 = vmul.f32 %v352, %v352
        %v357 = vmul.f32 %v353, %v353
        %v358 = vadd.f32 %v344, %v356
        %v359 = vadd.f32 %v345, %v357
        %v360 = vmax.f32 %v346, %v352
        %v361 = vmax.f32 %v347, %v353
        %v362 = vmin.f32 %v348, %v352
        %v363 = vmin.f32 %v349, %v353
        %s364 = sadd.s32 0, 80
        %s365 = scalar_lea.vmem %s255, %s364 [#allocation3]
        %v366 = vld [vmem:[%s365] sm:$0xff]
        %v367 = vld [vmem:[%s365 + $0x8] sm:$0xff]
        %v368 = vadd.f32 %v354, %v366
        %v369 = vadd.f32 %v355, %v367
        %v370 = vmul.f32 %v366, %v366
        %v371 = vmul.f32 %v367, %v367
        %v372 = vadd.f32 %v358, %v370
        %v373 = vadd.f32 %v359, %v371
        %v374 = vmax.f32 %v360, %v366
        %v375 = vmax.f32 %v361, %v367
        %v376 = vmin.f32 %v362, %v366
        %v377 = vmin.f32 %v363, %v367
        %s378 = sadd.s32 0, 96
        %s379 = scalar_lea.vmem %s255, %s378 [#allocation3]
        %v380 = vld [vmem:[%s379] sm:$0xff]
        %v381 = vld [vmem:[%s379 + $0x8] sm:$0xff]
        %v382 = vadd.f32 %v368, %v380
        %v383 = vadd.f32 %v369, %v381
        %v384 = vmul.f32 %v380, %v380
        %v385 = vmul.f32 %v381, %v381
        %v386 = vadd.f32 %v372, %v384
        %v387 = vadd.f32 %v373, %v385
        %v388 = vmax.f32 %v374, %v380
        %v389 = vmax.f32 %v375, %v381
        %v390 = vmin.f32 %v376, %v380
        %v391 = vmin.f32 %v377, %v381
        %s392 = sadd.s32 0, 112
        %s393 = scalar_lea.vmem %s255, %s392 [#allocation3]
        %v394 = vld [vmem:[%s393] sm:$0xff]
        %v395 = vld [vmem:[%s393 + $0x8] sm:$0xff]
        %v396 = vadd.f32 %v382, %v394
        %v397 = vadd.f32 %v383, %v395
        %v398 = vmul.f32 %v394, %v394
        %v399 = vmul.f32 %v395, %v395
        %v400 = vadd.f32 %v386, %v398
        %v401 = vadd.f32 %v387, %v399
        %v402 = vmax.f32 %v388, %v394
        %v403 = vmax.f32 %v389, %v395
        %v404 = vmin.f32 %v390, %v394
        %v405 = vmin.f32 %v391, %v395
        %v406 = vmul.f32 %v396, 0.125
        %v407 = vmul.f32 %v397, 0.125
        %v408 = vmul.f32 %v400, 0.125
        %v409 = vmul.f32 %v401, 0.125
        %v410 = vmul.f32 %v406, %v406
        %v411 = vmul.f32 %v407, %v407
        %v412 = vsub.f32 %v408, %v410
        %v413 = vsub.f32 %v409, %v411
        %v414 = vmax.f32 %v412, 0.0
        %v415 = vmax.f32 %v413, 0.0
        %v416 = vadd.f32 %v414, 1e-05
        %v417 = vadd.f32 %v415, 1e-05
        %v418 = vrsqrt.pop %v416
        %v419 = vmul.f32 %v418, %v416
        %v420 = vmul.f32 %v419, %v418
        %v421 = vmul.f32 0.5, %v420
        %v422 = vsub.f32 1.5, %v421
        %v423 = vmul.f32 %v418, %v422
        %v424 = vmul.f32 %v416, %v423
        %vm425 = vcmp.eq.f32.partialorder %v416, inf
        %v426 = vsel %vm425, %v416, %v424
        %vm427 = vcmp.eq.f32.partialorder %v416, 0.0
        %v428 = vand.u32 %v416, 2147483648
        %v429 = vsel %vm427, %v428, %v426
        %v430 = vrsqrt.pop %v417
        %v431 = vmul.f32 %v430, %v417
        %v432 = vmul.f32 %v431, %v430
        %v433 = vmul.f32 0.5, %v432
        %v434 = vsub.f32 1.5, %v433
        %v435 = vmul.f32 %v430, %v434
        %v436 = vmul.f32 %v417, %v435
        %vm437 = vcmp.eq.f32.partialorder %v417, inf
        %v438 = vsel %vm437, %v417, %v436
        %vm439 = vcmp.eq.f32.partialorder %v417, 0.0
        %v440 = vand.u32 %v417, 2147483648
        %v441 = vsel %vm439, %v440, %v438
        %s442 = smul.u32 0, 4
        %s443 = smul.addr %s442, 8
        %s444 = scalar_lea.vmem [#allocation2], %s443
        %445 = vst [vmem:[%s444] sm:$0xff] %v406
        %446 = vst [vmem:[%s444 + $0x20] sm:$0xff] %v407
        %447 = vst [vmem:[%s444 + $0x8] sm:$0xff] %v402
        %448 = vst [vmem:[%s444 + $0x28] sm:$0xff] %v403
        %449 = vst [vmem:[%s444 + $0x10] sm:$0xff] %v404
        %450 = vst [vmem:[%s444 + $0x30] sm:$0xff] %v405
        %451 = vst [vmem:[%s444 + $0x18] sm:$0xff] %v429
        %452 = vst [vmem:[%s444 + $0x38] sm:$0xff] %v441
        %v453 = vld [vmem:[#allocation2] sm:$0xff]
        %v454 = vld [vmem:[#allocation2 + $0x8] sm:$0xff]
        %v455 = vld [vmem:[#allocation2 + $0x10] sm:$0xff]
        %v456 = vld [vmem:[#allocation2 + $0x18] sm:$0xff]
        %v457 = vld [vmem:[#allocation2 + $0x20] sm:$0xff]
        %v458 = vld [vmem:[#allocation2 + $0x28] sm:$0xff]
        %v459 = vld [vmem:[#allocation2 + $0x30] sm:$0xff]
        %v460 = vld [vmem:[#allocation2 + $0x38] sm:$0xff]
        %v461 = vld [vmem:[#allocation8] sm:$0xff]
        %v462 = vld [vmem:[#allocation8 + $0x8] sm:$0xff]
        %v463 = vld [vmem:[#allocation8 + $0x10] sm:$0xff]
        %v464 = vld [vmem:[#allocation8 + $0x18] sm:$0xff]
        %v465 = vld [vmem:[#allocation8 + $0x20] sm:$0xff]
        %v466 = vld [vmem:[#allocation8 + $0x28] sm:$0xff]
        %v467 = vld [vmem:[#allocation8 + $0x30] sm:$0xff]
        %v468 = vld [vmem:[#allocation8 + $0x38] sm:$0xff]
        %v469 = vld [vmem:[#allocation8 + $0x40] sm:$0xff]
        %v470 = vld [vmem:[#allocation8 + $0x48] sm:$0xff]
        %v471 = vld [vmem:[#allocation8 + $0x50] sm:$0xff]
        %v472 = vld [vmem:[#allocation8 + $0x58] sm:$0xff]
        %v473 = vld [vmem:[#allocation8 + $0x60] sm:$0xff]
        %v474 = vld [vmem:[#allocation8 + $0x68] sm:$0xff]
        %v475 = vld [vmem:[#allocation8 + $0x70] sm:$0xff]
        %v476 = vld [vmem:[#allocation8 + $0x78] sm:$0xff]
        %v477 = vld [vmem:[#allocation8 + $0x80] sm:$0xff]
        %v478 = vld [vmem:[#allocation8 + $0x88] sm:$0xff]
        %v479 = vld [vmem:[#allocation8 + $0x90] sm:$0xff]
        %v480 = vld [vmem:[#allocation8 + $0x98] sm:$0xff]
        %v481 = vld [vmem:[#allocation8 + $0xa0] sm:$0xff]
        %v482 = vld [vmem:[#allocation8 + $0xa8] sm:$0xff]
        %v483 = vld [vmem:[#allocation8 + $0xb0] sm:$0xff]
        %v484 = vld [vmem:[#allocation8 + $0xb8] sm:$0xff]
        %v485 = vld [vmem:[#allocation8 + $0xc0] sm:$0xff]
        %v486 = vld [vmem:[#allocation8 + $0xc8] sm:$0xff]
        %v487 = vld [vmem:[#allocation8 + $0xd0] sm:$0xff]
        %v488 = vld [vmem:[#allocation8 + $0xd8] sm:$0xff]
        %v489 = vld [vmem:[#allocation8 + $0xe0] sm:$0xff]
        %v490 = vld [vmem:[#allocation8 + $0xe8] sm:$0xff]
        %v491 = vld [vmem:[#allocation8 + $0xf0] sm:$0xff]
        %v492 = vld [vmem:[#allocation8 + $0xf8] sm:$0xff]
        %v493 = vld [vmem:[#allocation8 + $0x100] sm:$0xff]
        %v494 = vld [vmem:[#allocation8 + $0x108] sm:$0xff]
        %v495 = vld [vmem:[#allocation8 + $0x110] sm:$0xff]
        %v496 = vld [vmem:[#allocation8 + $0x118] sm:$0xff]
        %v497 = vld [vmem:[#allocation8 + $0x120] sm:$0xff]
        %v498 = vld [vmem:[#allocation8 + $0x128] sm:$0xff]
        %v499 = vld [vmem:[#allocation8 + $0x130] sm:$0xff]
        %v500 = vld [vmem:[#allocation8 + $0x138] sm:$0xff]
        %v501 = vld [vmem:[#allocation8 + $0x140] sm:$0xff]
        %v502 = vld [vmem:[#allocation8 + $0x148] sm:$0xff]
        %v503 = vld [vmem:[#allocation8 + $0x150] sm:$0xff]
        %v504 = vld [vmem:[#allocation8 + $0x158] sm:$0xff]
        %v505 = vld [vmem:[#allocation8 + $0x160] sm:$0xff]
        %v506 = vld [vmem:[#allocation8 + $0x168] sm:$0xff]
        %v507 = vld [vmem:[#allocation8 + $0x170] sm:$0xff]
        %v508 = vld [vmem:[#allocation8 + $0x178] sm:$0xff]
        %v509 = vld [vmem:[#allocation8 + $0x180] sm:$0xff]
        %v510 = vld [vmem:[#allocation8 + $0x188] sm:$0xff]
        %v511 = vld [vmem:[#allocation8 + $0x190] sm:$0xff]
        %v512 = vld [vmem:[#allocation8 + $0x198] sm:$0xff]
        %v513 = vld [vmem:[#allocation8 + $0x1a0] sm:$0xff]
        %v514 = vld [vmem:[#allocation8 + $0x1a8] sm:$0xff]
        %v515 = vld [vmem:[#allocation8 + $0x1b0] sm:$0xff]
        %v516 = vld [vmem:[#allocation8 + $0x1b8] sm:$0xff]
        %v517 = vld [vmem:[#allocation8 + $0x1c0] sm:$0xff]
        %v518 = vld [vmem:[#allocation8 + $0x1c8] sm:$0xff]
        %v519 = vld [vmem:[#allocation8 + $0x1d0] sm:$0xff]
        %v520 = vld [vmem:[#allocation8 + $0x1d8] sm:$0xff]
        %v521 = vld [vmem:[#allocation8 + $0x1e0] sm:$0xff]
        %v522 = vld [vmem:[#allocation8 + $0x1e8] sm:$0xff]
        %v523 = vld [vmem:[#allocation8 + $0x1f0] sm:$0xff]
        %v524 = vld [vmem:[#allocation8 + $0x1f8] sm:$0xff]
        %v525 = vld [vmem:[%s3] sm:$0x1]
        %v527 = vperm.slane %v525, 0
        %529 = vmatpush.msra.mxu0 %v476
        %530 = vmatpush.msra.mxu0 %v475
        %531 = vmatpush.msra.mxu0 %v474
        %532 = vmatpush.msra.mxu0 %v473
        %533 = vmatpush.msra.mxu0 %v472
        %534 = vmatpush.msra.mxu0 %v471
        %535 = vmatpush.msra.mxu0 %v470
        %536 = vmatpush.msra.mxu0 %v469
        %537 = vmatpush.msra.mxu0 %v468
        %538 = vmatpush.msra.mxu0 %v467
        %539 = vmatpush.msra.mxu0 %v466
        %540 = vmatpush.msra.mxu0 %v465
        %541 = vmatpush.msra.mxu0 %v464
        %542 = vmatpush.msra.mxu0 %v463
        %543 = vmatpush.msra.mxu0 %v462
        %544 = vmatpush.msra.mxu0 %v461
        %545 = vmatmul.f32.gmra.mxu0 %v453
        %v546 = vpop.f32.mrf.mxu0
        %v547 = vadd.f32 %v527, %v546
        %548 = vmatmul.f32.gmra.mxu0 %v457
        %v549 = vpop.f32.mrf.mxu0
        %v550 = vadd.f32 %v527, %v549
        %551 = vdwg.mxu0
        %552 = vmatpush.msra.mxu0 %v492
        %553 = vmatpush.msra.mxu0 %v491
        %554 = vmatpush.msra.mxu0 %v490
        %555 = vmatpush.msra.mxu0 %v489
        %556 = vmatpush.msra.mxu0 %v488
        %557 = vmatpush.msra.mxu0 %v487
        %558 = vmatpush.msra.mxu0 %v486
        %559 = vmatpush.msra.mxu0 %v485
        %560 = vmatpush.msra.mxu0 %v484
        %561 = vmatpush.msra.mxu0 %v483
        %562 = vmatpush.msra.mxu0 %v482
        %563 = vmatpush.msra.mxu0 %v481
        %564 = vmatpush.msra.mxu0 %v480
        %565 = vmatpush.msra.mxu0 %v479
        %566 = vmatpush.msra.mxu0 %v478
        %567 = vmatpush.msra.mxu0 %v477
        %568 = vmatmul.f32.gmra.mxu0 %v454
        %v569 = vpop.f32.mrf.mxu0
        %v570 = vadd.f32 %v547, %v569
        %571 = vmatmul.f32.gmra.mxu0 %v458
        %v572 = vpop.f32.mrf.mxu0
        %v573 = vadd.f32 %v550, %v572
        %574 = vdwg.mxu0
        %575 = vmatpush.msra.mxu0 %v508
        %576 = vmatpush.msra.mxu0 %v507
        %577 = vmatpush.msra.mxu0 %v506
        %578 = vmatpush.msra.mxu0 %v505
        %579 = vmatpush.msra.mxu0 %v504
        %580 = vmatpush.msra.mxu0 %v503
        %581 = vmatpush.msra.mxu0 %v502
        %582 = vmatpush.msra.mxu0 %v501
        %583 = vmatpush.msra.mxu0 %v500
        %584 = vmatpush.msra.mxu0 %v499
        %585 = vmatpush.msra.mxu0 %v498
        %586 = vmatpush.msra.mxu0 %v497
        %587 = vmatpush.msra.mxu0 %v496
        %588 = vmatpush.msra.mxu0 %v495
        %589 = vmatpush.msra.mxu0 %v494
        %590 = vmatpush.msra.mxu0 %v493
        %591 = vmatmul.f32.gmra.mxu0 %v455
        %v592 = vpop.f32.mrf.mxu0
        %v593 = vadd.f32 %v570, %v592
        %594 = vmatmul.f32.gmra.mxu0 %v459
        %v595 = vpop.f32.mrf.mxu0
        %v596 = vadd.f32 %v573, %v595
        %597 = vdwg.mxu0
        %598 = vmatpush.msra.mxu0 %v524
        %599 = vmatpush.msra.mxu0 %v523
        %600 = vmatpush.msra.mxu0 %v522
        %601 = vmatpush.msra.mxu0 %v521
        %602 = vmatpush.msra.mxu0 %v520
        %603 = vmatpush.msra.mxu0 %v519
        %604 = vmatpush.msra.mxu0 %v518
        %605 = vmatpush.msra.mxu0 %v517
        %606 = vmatpush.msra.mxu0 %v516
        %607 = vmatpush.msra.mxu0 %v515
        %608 = vmatpush.msra.mxu0 %v514
        %609 = vmatpush.msra.mxu0 %v513
        %610 = vmatpush.msra.mxu0 %v512
        %611 = vmatpush.msra.mxu0 %v511
        %612 = vmatpush.msra.mxu0 %v510
        %613 = vmatpush.msra.mxu0 %v509
        %614 = vmatmul.f32.gmra.mxu0 %v456
        %v615 = vpop.f32.mrf.mxu0
        %v616 = vadd.f32 %v593, %v615
        %617 = vmatmul.f32.gmra.mxu0 %v460
        %v618 = vpop.f32.mrf.mxu0
        %v619 = vadd.f32 %v596, %v618
        %620 = vdwg.mxu0
        %v621 = vmax.f32 %v616, 0.0
        %v622 = vmax.f32 %v619, 0.0
        %v623 = vld [vmem:[%s265] sm:$0xff]
        %v624 = vld [vmem:[%s265 + $0x8] sm:$0xff]
        %v625 = vadd.f32 %v621, %v623
        %v626 = vadd.f32 %v622, %v624
        %627 = vst [vmem:[%s300] sm:$0xff] %v625
        %628 = vst [vmem:[%s300 + $0x8] sm:$0xff] %v626
        %s629 = sand.u32 %s126, 1
        %s630 = scalar_lea.sflag [#allocation5], %s629
        %s631 = sand.u32 %s126, 1
        %s632 = smul.addr %s631, 16
        %s633 = scalar_lea.vmem [#allocation9], %s632
        // Predicated region
        $region49: #{tpu_custom_call.1} parent=35 // pred_check
          %p634 = pneg %p136
        $region50: #{tpu_custom_call.1} parent=35 // pred_check_branch
          %636 = sbr.rel (%p634) target = $region52
        $region51: #{tpu_custom_call.1} parent=35 // pred_region
          %s637 = smul.u32 2, %s24
          %639 = vsyncadd %s630, 0
          %s640 = smul.addr %s637, 8
          %s641 = scalar_lea.hbm %s4, %s640
          %s642 = sshll.u32 %s633, 4
          %s643 = int_to_ptr.vmem [resolvable:$true] %s642
          %s644 = sshll.u32 %s641, 4
          %s645 = int_to_ptr.hbm [resolvable:$true] %s644
          %650 = dma.vmem_to_hbm [thread:$0]  %s643, 256, %s645, %s630, 128, 128, 8
        $region52: #{tpu_custom_call.1} parent=35 // pred_fallthru
          _
      $region36: #{tpu_custom_call.1} parent=5 // pred_fallthru
        _
      %p651 = scmp.le.s32.totalorder 2, %s19
      // Predicated region
      $region53: #{tpu_custom_call.1} parent=5 // pred_check
        %p652 = pneg %p651
      $region54: #{tpu_custom_call.1} parent=5 // pred_check_branch
        %654 = sbr.rel (%p652) target = $region56
      $region55: #{tpu_custom_call.1} parent=5 // pred_region
        %s655 = ssub.s32 %s19, 2
        // Predicated region
        $region57: #{tpu_custom_call.1} parent=55 // pred_check
          %p656 = pneg %p142
        $region58: #{tpu_custom_call.1} parent=55 // pred_check_branch
          %658 = sbr.rel (%p656) target = $region60
        $region59: #{tpu_custom_call.1} parent=55 // pred_region
          %s659 = sand.u32 %s127, 1
          %s660 = scalar_lea.sflag [#allocation5], %s659
          %s661 = sand.u32 %s127, 1
          %s662 = smul.addr %s661, 16
          %s663 = scalar_lea.vmem [#allocation9], %s662
          %665 = dma.done %s660, 256
        $region60: #{tpu_custom_call.1} parent=55 // pred_fallthru
          _
      $region56: #{tpu_custom_call.1} parent=5 // pred_fallthru
        _
    $region6: #{tpu_custom_call.1} parent=1 // loop_footer
      %s23 = sadd.s32 1, %s19
    $region7: #{tpu_custom_call.1} parent=1 // loop_footer_branch
      %18 = sbr.rel target = $region3
    $region8: #{tpu_custom_call.1} parent=1 // loop_exit
      _
    %666 = vsyncpa [#allocation4], 1
    %s667 = scalar_lea.sflag [#allocation4], 1
    %668 = vsyncpa %s667, 1
    %669 = vsyncpa [#allocation7], 1
    %s670 = scalar_lea.sflag [#allocation7], 1
    %671 = vsyncpa %s670, 1
    %672 = vsyncpa [#allocation5], 1
    %s673 = scalar_lea.sflag [#allocation5], 1
    %674 = vsyncpa %s673, 1

</llo_original>
